<compile_context>
chip_gen: v7x
topology: tpu7x:2x2x1
jax: 0.10.0
libtpu: 0.0.40
codegen_flags: <defaults>
</compile_context>

<pallas_src>
import functools

import jax
import jax.numpy as jnp
import numpy as np
from jax import lax
from jax.experimental import pallas as pl
from jax.experimental.pallas import tpu as pltpu

NEG_SLOPE = 0.2      # DGL default negative_slope for leaky_relu
MASK_BIAS = -1e30    # additive mask for non-edges (logits stay f32, so no overflow)


def _aggr_gat_kernel(aggr, num_heads, tile_n, out_f, compute_dtype, approx_recip,
                     x_ref, waug_ref, wal_ref, adjb_ref, b_ref,
                     out_ref, z_scr, el_scr):
    t = pl.program_id(0)          # destination-node tile (parallel axis)
    h = pl.program_id(1)          # head (innermost reduction/accumulation axis)
    F = out_f
    F1 = F + 1                    # per-head projection width: [z | er]

    # ---- once per dst tile (h == 0): head-batched lane-dense projection ----------
    # Recomputed per tile (not once globally) so the dst axis stays megacore-safe.
    # Cost N*Cin*H*(F+1) flops per tile, small next to the tile's H*tile_n*N*F
    # message matmuls (ratio ~ Cin/tile_n).
    @pl.when(h == 0)
    def _project():
        xc = x_ref[...].astype(compute_dtype)                          # (N, Cin)
        zall = jnp.dot(xc, waug_ref[...].astype(compute_dtype),
                       preferred_element_type=jnp.float32)             # (N, H*(F+1))
        el_all = lax.dot_general(wal_ref[...].astype(compute_dtype), xc,
                                 (((1,), (1,)), ((), ())),
                                 preferred_element_type=jnp.float32)   # (H, N)
        for hh in range(num_heads):          # static loop -> static lane slices
            z_scr[hh] = zall[:, hh * F1:(hh + 1) * F1]                 # [z_h | er_h]
            el_scr[hh] = el_all[hh:hh + 1, :]                          # (1, N)

    # ---- per (tile, head): logits -> masked softmax -> messages -------------------
    row0 = pl.multiple_of(t * tile_n, tile_n)
    z = z_scr[h, :, 0:F]                                               # (N, F) src feats
    er_col = z_scr[h, pl.ds(row0, tile_n), F:F + 1]                    # (tile_n, 1) dst scores
    el_row = el_scr[h]                                                 # (1, N) src scores

    e = er_col + el_row                                                # (tile_n, N) logits
    e = jnp.maximum(e, NEG_SLOPE * e)                                  # leaky_relu
    e = e + adjb_ref[...]                                              # additive edge mask (bf16)
    e = e - jnp.max(e, axis=-1, keepdims=True)                         # row-wise edge-softmax
    p = jnp.exp(e)                                                     # masked entries underflow to 0
    denom = jnp.sum(p, axis=-1, keepdims=True)                         # (tile_n, 1)

    # deferred normalization: (p @ z) * (1/denom) instead of forming alpha
    rst = jnp.dot(p.astype(compute_dtype), z.astype(compute_dtype),
                  preferred_element_type=jnp.float32)                  # (tile_n, F)
    rst = rst * pl.reciprocal(denom, approx=approx_recip) + b_ref[0]

    # ---- accumulate heads directly into the resident output block -----------------
    @pl.when(h == 0)
    def _first():
        out_ref[...] = rst

    @pl.when(h != 0)
    def _rest():
        if aggr == "max":
            out_ref[...] = jnp.maximum(out_ref[...], rst)
        else:
            out_ref[...] = out_ref[...] + rst

    if aggr == "mean":
        @pl.when(h == num_heads - 1)
        def _finalize():
            out_ref[...] = out_ref[...] * (1.0 / num_heads)


def _pick_dst_tile(n, target):
    """Largest multiple of 8 that divides n and is <= target (or n itself)."""
    if n <= target:
        return n
    best = n
    for cand in range(8, min(n, target) + 1, 8):
        if n % cand == 0:
            best = cand
    return best


def aggr_gat_conv(feat, adj, params, *, aggr="mean", use_bf16_mxu=True, dst_tile=256):
    """Pallas AggrGATConv forward: dense-mask GAT attention + head aggregation.

    dst_tile: destination-node tile size (tune smaller on v5e, larger on v6e).
    use_bf16_mxu: cast MXU operands to bf16 (softmax math stays f32).
    """
    W, attn_l, attn_r, bias = (params["W"], params["attn_l"],
                               params["attn_r"], params["bias"])
    H, Cin, F = W.shape
    N = feat.shape[0]
    assert feat.shape == (N, Cin) and adj.shape == (N, N)
    if aggr not in ("mean", "sum", "max"):
        # TODO(synk): EGATConv edge-feature path (f_fij / res_e), aggr='fc' head-mixing
        # Linear and the get_attention output are not implemented in the kernel.
        raise NotImplementedError(f"aggr={aggr!r} not supported by the Pallas kernel")

    # ---- parameter-only preprocessing (tiny, O(H*Cin*F)) --------------------------
    hp = lax.Precision.HIGHEST
    al = attn_l[:, 0, :]                                           # (H, F)
    ar = attn_r[:, 0, :]
    wal = jnp.einsum("hcf,hf->hc", W, al, precision=hp)            # folded src-score weights
    war = jnp.einsum("hcf,hf->hc", W, ar, precision=hp)            # folded dst-score weights
    # lane-dense per-head projection weights [W_h | war_h] -> (Cin, H*(F+1))
    w_aug = jnp.concatenate([W, war[:, :, None]], axis=2)          # (H, Cin, F+1)
    w_aug = jnp.transpose(w_aug, (1, 0, 2)).reshape(Cin, H * (F + 1))
    # additive edge mask, stored bf16 (exact 0 / ~-1e30) -> half the DMA/VMEM of adj
    adj_bias = jnp.where(adj > 0.0, 0.0, MASK_BIAS).astype(jnp.bfloat16)

    compute_dtype = jnp.bfloat16 if use_bf16_mxu else jnp.float32
    tile_n = _pick_dst_tile(N, dst_tile)
    num_tiles = N // tile_n
    F1 = F + 1

    # scoped-VMEM budget for this tiling (2x headroom over a rough estimate)
    est = (2 * tile_n * N * 2          # adj_bias tile, double-buffered, bf16
           + 2 * N * Cin * 4           # full feat block
           + H * N * F1 * 4            # z_scr ([z | er] per head)
           + H * 8 * N * 4             # el_scr (sublane-padded)
           + 8 * tile_n * N * 4        # logits / exp temporaries headroom
           + 4 * tile_n * 128 * 4)     # output block (lane-padded)
    vmem_limit = int(min(56 * 2 ** 20, max(32 * 2 ** 20, 2 * est)))

    kernel = functools.partial(_aggr_gat_kernel, aggr, H, tile_n, F,
                               compute_dtype, use_bf16_mxu)
    grid_spec = pltpu.PrefetchScalarGridSpec(
        num_scalar_prefetch=0,
        grid=(num_tiles, H),                                        # head axis innermost
        in_specs=[
            pl.BlockSpec((N, Cin), lambda t, h: (0, 0)),            # feat (full, all src)
            pl.BlockSpec((Cin, H * F1), lambda t, h: (0, 0)),       # W_aug (full)
            pl.BlockSpec((H, Cin), lambda t, h: (0, 0)),            # wal (full)
            pl.BlockSpec((tile_n, N), lambda t, h: (t, 0)),         # adj_bias rows of this tile
            pl.BlockSpec((1, 1, F), lambda t, h: (h, 0, 0)),        # bias[h]
        ],
        out_specs=pl.BlockSpec((tile_n, F), lambda t, h: (t, 0)),   # resident over h
        scratch_shapes=[
            pltpu.VMEM((H, N, F1), jnp.float32),                    # per-head [z | er]
            pltpu.VMEM((H, 1, N), jnp.float32),                     # per-head el (row layout)
        ],
    )
    return pl.pallas_call(
        kernel,
        out_shape=jax.ShapeDtypeStruct((N, F), jnp.float32),
        grid_spec=grid_spec,
        compiler_params=pltpu.CompilerParams(
            dimension_semantics=("parallel", "arbitrary"),
            vmem_limit_bytes=vmem_limit),
    )(feat, w_aug, wal, adj_bias, bias)


def ref_aggr_gat_conv(feat, adj, params, *, aggr="mean"):
    """Pure-JAX reference of the same dense-mask GAT attention + head aggregation."""
    W, al, ar, b = (params["W"], params["attn_l"], params["attn_r"], params["bias"])
    z = jnp.einsum("nc,hcf->hnf", feat, W)                     # (H, N, F)
    el = jnp.einsum("hnf,hof->hn", z, al)                      # src scores (H, N)
    er = jnp.einsum("hnf,hof->hn", z, ar)                      # dst scores (H, N)
    e = er[:, :, None] + el[:, None, :]                        # (H, N_dst, N_src)
    e = jnp.where(e > 0, e, NEG_SLOPE * e)
    mask = (adj > 0.0)[None]
    e = jnp.where(mask, e, MASK_BIAS)
    e = e - jnp.max(e, axis=-1, keepdims=True)
    p = jnp.where(mask, jnp.exp(e), 0.0)
    alpha = p / jnp.sum(p, axis=-1, keepdims=True)
    rst = jnp.einsum("hds,hsf->hdf", alpha, z) + b             # (H, N, F)
    if aggr == "mean":
        return rst.mean(axis=0)
    if aggr == "sum":
        return rst.sum(axis=0)
    if aggr == "max":
        return rst.max(axis=0)
    raise NotImplementedError(aggr)


if __name__ == "__main__":
    # Small, deterministic synthetic setup:
    #   N=16 nodes, in_feats=8, out_feats=8, num_heads=4, aggr='mean'
    N, IN_FEATS, OUT_FEATS, NUM_HEADS = 16, 8, 8, 4
    AGGR = "mean"

    key = jax.random.PRNGKey(0)
    k_feat, k_adj, k_w, k_al, k_ar, k_b = jax.random.split(key, 6)

    feat = jax.random.normal(k_feat, (N, IN_FEATS), dtype=jnp.float32)

    # Random directed graph with guaranteed self-loops (no zero in-degree nodes,
    # matching DGL's allow_zero_in_degree=False requirement).
    rand_adj = jax.random.uniform(k_adj, (N, N)) < 0.3
    adj = jnp.where(rand_adj | jnp.eye(N, dtype=bool), 1.0, 0.0).astype(jnp.float32)

    params = {
        "W": 0.2 * jax.random.normal(k_w, (NUM_HEADS, IN_FEATS, OUT_FEATS), dtype=jnp.float32),
        "attn_l": 0.2 * jax.random.normal(k_al, (NUM_HEADS, 1, OUT_FEATS), dtype=jnp.float32),
        "attn_r": 0.2 * jax.random.normal(k_ar, (NUM_HEADS, 1, OUT_FEATS), dtype=jnp.float32),
        "bias": 0.1 * jax.random.normal(k_b, (NUM_HEADS, 1, OUT_FEATS), dtype=jnp.float32),
    }

    ref = jax.block_until_ready(ref_aggr_gat_conv(feat, adj, params, aggr=AGGR))

    # Exactness path: f32 MXU operands, exact reciprocal.
    out_f32 = jax.block_until_ready(
        aggr_gat_conv(feat, adj, params, aggr=AGGR, use_bf16_mxu=False))
    np.testing.assert_allclose(np.asarray(out_f32), np.asarray(ref), rtol=2e-3, atol=2e-3)

    # Perf-default path: bf16 MXU operands (bf16-native MXUs on v5e/v6e/v7x),
    # f32 softmax math; validated at bf16-appropriate tolerance.
    out_bf16 = jax.block_until_ready(
        aggr_gat_conv(feat, adj, params, aggr=AGGR, use_bf16_mxu=True))
    np.testing.assert_allclose(np.asarray(out_bf16), np.asarray(ref), rtol=5e-2, atol=5e-2)

    print("KERNEL_OK")
</pallas_src>

<mosaic_0001>
module attributes {stable_mosaic.version = 11 : i64} {
  func.func @_aggr_gat_kernel(%arg0: i32, %arg1: i32, %arg2: memref<16x8xf32, #tpu.memory_space<vmem>>, %arg3: memref<8x36xf32, #tpu.memory_space<vmem>>, %arg4: memref<4x8xf32, #tpu.memory_space<vmem>>, %arg5: memref<16x16xbf16, #tpu.memory_space<vmem>>, %arg6: memref<1x1x8xf32, #tpu.memory_space<vmem>>, %arg7: memref<16x8xf32, #tpu.memory_space<vmem>>, %arg8: memref<4x16x9xf32, #tpu.memory_space<vmem>>, %arg9: memref<4x1x16xf32, #tpu.memory_space<vmem>>) attributes {dimension_semantics = [#tpu.dimension_semantics<parallel>, #tpu.dimension_semantics<arbitrary>], iteration_bounds = array<i64: 1, 4>, scalar_prefetch = 0 : i64, scratch_operands = 2 : i64, tpu.core_type = #tpu.core_type<tc>, window_params = [{pipeline_mode = #tpu.pipeline_mode<synchronous>, transform_indices = @transform_0, window_bounds = array<i64: 16, 8>}, {pipeline_mode = #tpu.pipeline_mode<synchronous>, transform_indices = @transform_1, window_bounds = array<i64: 8, 36>}, {pipeline_mode = #tpu.pipeline_mode<synchronous>, transform_indices = @transform_2, window_bounds = array<i64: 4, 8>}, {transform_indices = @transform_3, window_bounds = array<i64: 16, 16>}, {transform_indices = @transform_4, window_bounds = array<i64: 1, 1, 8>}, {transform_indices = @transform_5, window_bounds = array<i64: 16, 8>}]} {
    %c0_i32 = arith.constant 0 : i32
    %0 = arith.cmpi eq, %arg1, %c0_i32 : i32
    %1 = arith.extui %0 : i1 to i32
    %c0_i32_0 = arith.constant 0 : i32
    %2 = arith.cmpi ne, %1, %c0_i32_0 : i32
    scf.if %2 {
      %c0_17 = arith.constant 0 : index
      %c0_18 = arith.constant 0 : index
      %48 = vector.load %arg2[%c0_17, %c0_18] : memref<16x8xf32, #tpu.memory_space<vmem>>, vector<16x8xf32>
      %c0_19 = arith.constant 0 : index
      %c0_20 = arith.constant 0 : index
      %49 = vector.load %arg3[%c0_19, %c0_20] : memref<8x36xf32, #tpu.memory_space<vmem>>, vector<8x36xf32>
      %cst_21 = arith.constant dense<0.000000e+00> : vector<16x36xf32>
      %50 = tpu.matmul %48, %49, %cst_21 {dimension_numbers = #tpu.dot_dimension_numbers<[1], [0], [0], [1], [0, 0, 1, 1], [], []>} : vector<16x8xf32>, vector<8x36xf32>, vector<16x36xf32> -> vector<16x36xf32>
      %c0_22 = arith.constant 0 : index
      %c0_23 = arith.constant 0 : index
      %51 = vector.load %arg4[%c0_22, %c0_23] : memref<4x8xf32, #tpu.memory_space<vmem>>, vector<4x8xf32>
      %cst_24 = arith.constant dense<0.000000e+00> : vector<4x16xf32>
      %52 = tpu.matmul %51, %48, %cst_24 {dimension_numbers = #tpu.dot_dimension_numbers<[1], [1], [0], [0], [0, 0, 1, 0], [], []>} : vector<4x8xf32>, vector<16x8xf32>, vector<4x16xf32> -> vector<4x16xf32>
      %53 = vector.extract_strided_slice %50 {offsets = [0, 0], sizes = [16, 9], strides = [1, 1]} : vector<16x36xf32> to vector<16x9xf32>
      %c0_25 = arith.constant 0 : index
      %c0_26 = arith.constant 0 : index
      %c0_27 = arith.constant 0 : index
      %54 = vector.load %arg8[%c0_25, %c0_26, %c0_27] : memref<4x16x9xf32, #tpu.memory_space<vmem>>, vector<1x16x9xf32>
      %55 = vector.shape_cast %54 : vector<1x16x9xf32> to vector<16x9xf32>
      %56 = vector.shape_cast %53 : vector<16x9xf32> to vector<1x16x9xf32>
      tpu.vector_store %arg8[%c0_25, %c0_26, %c0_27], %56 {strides = array<i32>} : memref<4x16x9xf32, #tpu.memory_space<vmem>>, vector<1x16x9xf32>,
      %57 = vector.extract_strided_slice %52 {offsets = [0, 0], sizes = [1, 16], strides = [1, 1]} : vector<4x16xf32> to vector<1x16xf32>
      %c0_28 = arith.constant 0 : index
      %c0_29 = arith.constant 0 : index
      %c0_30 = arith.constant 0 : index
      %58 = vector.load %arg9[%c0_28, %c0_29, %c0_30] : memref<4x1x16xf32, #tpu.memory_space<vmem>>, vector<1x1x16xf32>
      %59 = vector.shape_cast %58 : vector<1x1x16xf32> to vector<1x16xf32>
      %60 = vector.shape_cast %57 : vector<1x16xf32> to vector<1x1x16xf32>
      tpu.vector_store %arg9[%c0_28, %c0_29, %c0_30], %60 {strides = array<i32>} : memref<4x1x16xf32, #tpu.memory_space<vmem>>, vector<1x1x16xf32>,
      %61 = vector.extract_strided_slice %50 {offsets = [0, 9], sizes = [16, 9], strides = [1, 1]} : vector<16x36xf32> to vector<16x9xf32>
      %c1 = arith.constant 1 : index
      %c0_31 = arith.constant 0 : index
      %c0_32 = arith.constant 0 : index
      %62 = vector.load %arg8[%c1, %c0_31, %c0_32] : memref<4x16x9xf32, #tpu.memory_space<vmem>>, vector<1x16x9xf32>
      %63 = vector.shape_cast %62 : vector<1x16x9xf32> to vector<16x9xf32>
      %64 = vector.shape_cast %61 : vector<16x9xf32> to vector<1x16x9xf32>
      tpu.vector_store %arg8[%c1, %c0_31, %c0_32], %64 {strides = array<i32>} : memref<4x16x9xf32, #tpu.memory_space<vmem>>, vector<1x16x9xf32>,
      %65 = vector.extract_strided_slice %52 {offsets = [1, 0], sizes = [1, 16], strides = [1, 1]} : vector<4x16xf32> to vector<1x16xf32>
      %c1_33 = arith.constant 1 : index
      %c0_34 = arith.constant 0 : index
      %c0_35 = arith.constant 0 : index
      %66 = vector.load %arg9[%c1_33, %c0_34, %c0_35] : memref<4x1x16xf32, #tpu.memory_space<vmem>>, vector<1x1x16xf32>
      %67 = vector.shape_cast %66 : vector<1x1x16xf32> to vector<1x16xf32>
      %68 = vector.shape_cast %65 : vector<1x16xf32> to vector<1x1x16xf32>
      tpu.vector_store %arg9[%c1_33, %c0_34, %c0_35], %68 {strides = array<i32>} : memref<4x1x16xf32, #tpu.memory_space<vmem>>, vector<1x1x16xf32>,
      %69 = vector.extract_strided_slice %50 {offsets = [0, 18], sizes = [16, 9], strides = [1, 1]} : vector<16x36xf32> to vector<16x9xf32>
      %c2 = arith.constant 2 : index
      %c0_36 = arith.constant 0 : index
      %c0_37 = arith.constant 0 : index
      %70 = vector.load %arg8[%c2, %c0_36, %c0_37] : memref<4x16x9xf32, #tpu.memory_space<vmem>>, vector<1x16x9xf32>
      %71 = vector.shape_cast %70 : vector<1x16x9xf32> to vector<16x9xf32>
      %72 = vector.shape_cast %69 : vector<16x9xf32> to vector<1x16x9xf32>
      tpu.vector_store %arg8[%c2, %c0_36, %c0_37], %72 {strides = array<i32>} : memref<4x16x9xf32, #tpu.memory_space<vmem>>, vector<1x16x9xf32>,
      %73 = vector.extract_strided_slice %52 {offsets = [2, 0], sizes = [1, 16], strides = [1, 1]} : vector<4x16xf32> to vector<1x16xf32>
      %c2_38 = arith.constant 2 : index
      %c0_39 = arith.constant 0 : index
      %c0_40 = arith.constant 0 : index
      %74 = vector.load %arg9[%c2_38, %c0_39, %c0_40] : memref<4x1x16xf32, #tpu.memory_space<vmem>>, vector<1x1x16xf32>
      %75 = vector.shape_cast %74 : vector<1x1x16xf32> to vector<1x16xf32>
      %76 = vector.shape_cast %73 : vector<1x16xf32> to vector<1x1x16xf32>
      tpu.vector_store %arg9[%c2_38, %c0_39, %c0_40], %76 {strides = array<i32>} : memref<4x1x16xf32, #tpu.memory_space<vmem>>, vector<1x1x16xf32>,
      %77 = vector.extract_strided_slice %50 {offsets = [0, 27], sizes = [16, 9], strides = [1, 1]} : vector<16x36xf32> to vector<16x9xf32>
      %c3 = arith.constant 3 : index
      %c0_41 = arith.constant 0 : index
      %c0_42 = arith.constant 0 : index
      %78 = vector.load %arg8[%c3, %c0_41, %c0_42] : memref<4x16x9xf32, #tpu.memory_space<vmem>>, vector<1x16x9xf32>
      %79 = vector.shape_cast %78 : vector<1x16x9xf32> to vector<16x9xf32>
      %80 = vector.shape_cast %77 : vector<16x9xf32> to vector<1x16x9xf32>
      tpu.vector_store %arg8[%c3, %c0_41, %c0_42], %80 {strides = array<i32>} : memref<4x16x9xf32, #tpu.memory_space<vmem>>, vector<1x16x9xf32>,
      %81 = vector.extract_strided_slice %52 {offsets = [3, 0], sizes = [1, 16], strides = [1, 1]} : vector<4x16xf32> to vector<1x16xf32>
      %c3_43 = arith.constant 3 : index
      %c0_44 = arith.constant 0 : index
      %c0_45 = arith.constant 0 : index
      %82 = vector.load %arg9[%c3_43, %c0_44, %c0_45] : memref<4x1x16xf32, #tpu.memory_space<vmem>>, vector<1x1x16xf32>
      %83 = vector.shape_cast %82 : vector<1x1x16xf32> to vector<1x16xf32>
      %84 = vector.shape_cast %81 : vector<1x16xf32> to vector<1x1x16xf32>
      tpu.vector_store %arg9[%c3_43, %c0_44, %c0_45], %84 {strides = array<i32>} : memref<4x1x16xf32, #tpu.memory_space<vmem>>, vector<1x1x16xf32>,
    } else {
    }
    %c16_i32 = arith.constant 16 : i32
    %3 = arith.muli %arg0, %c16_i32 : i32
    %4 = tpu.assume_multiple %3, 16 : i32
    %5 = arith.index_cast %arg1 : i32 to index
    %c0 = arith.constant 0 : index
    %c0_1 = arith.constant 0 : index
    %6 = vector.load %arg8[%5, %c0, %c0_1] : memref<4x16x9xf32, #tpu.memory_space<vmem>>, vector<1x16x8xf32>
    %7 = vector.shape_cast %6 : vector<1x16x8xf32> to vector<16x8xf32>
    %8 = arith.index_cast %arg1 : i32 to index
    %9 = arith.index_cast %4 : i32 to index
    %c8 = arith.constant 8 : index
    %10 = vector.load %arg8[%8, %9, %c8] : memref<4x16x9xf32, #tpu.memory_space<vmem>>, vector<1x16x1xf32>
    %11 = vector.shape_cast %10 : vector<1x16x1xf32> to vector<16x1xf32>
    %12 = arith.index_cast %arg1 : i32 to index
    %c0_2 = arith.constant 0 : index
    %c0_3 = arith.constant 0 : index
    %13 = vector.load %arg9[%12, %c0_2, %c0_3] : memref<4x1x16xf32, #tpu.memory_space<vmem>>, vector<1x1x16xf32>
    %14 = vector.shape_cast %13 : vector<1x1x16xf32> to vector<1x16xf32>
    %15 = vector.broadcast %11 : vector<16x1xf32> to vector<16x16xf32>
    %16 = vector.broadcast %14 : vector<1x16xf32> to vector<16x16xf32>
    %17 = arith.addf %15, %16 : vector<16x16xf32>
    %cst = arith.constant 2.000000e-01 : f32
    %18 = vector.broadcast %cst : f32 to vector<16x16xf32>
    %19 = arith.mulf %18, %17 : vector<16x16xf32>
    %20 = arith.maximumf %17, %19 : vector<16x16xf32>
    %c0_4 = arith.constant 0 : index
    %c0_5 = arith.constant 0 : index
    %21 = vector.load %arg5[%c0_4, %c0_5] : memref<16x16xbf16, #tpu.memory_space<vmem>>, vector<16x16xbf16>
    %22 = arith.extf %21 : vector<16x16xbf16> to vector<16x16xf32>
    %23 = arith.addf %20, %22 : vector<16x16xf32>
    %cst_6 = arith.constant dense<0xFF800000> : vector<16xf32>
    %24 = vector.multi_reduction <maximumf>, %23, %cst_6 [1] : vector<16x16xf32> to vector<16xf32>
    %25 = vector.shape_cast %24 : vector<16xf32> to vector<16x1xf32>
    %26 = vector.broadcast %25 : vector<16x1xf32> to vector<16x16xf32>
    %27 = arith.subf %23, %26 : vector<16x16xf32>
    %28 = math.exp %27 : vector<16x16xf32>
    %cst_7 = arith.constant dense<0.000000e+00> : vector<16xf32>
    %29 = vector.multi_reduction <add>, %28, %cst_7 [1] : vector<16x16xf32> to vector<16xf32>
    %30 = vector.shape_cast %29 : vector<16xf32> to vector<16x1xf32>
    %cst_8 = arith.constant dense<0.000000e+00> : vector<16x8xf32>
    %31 = tpu.matmul %28, %7, %cst_8 {dimension_numbers = #tpu.dot_dimension_numbers<[1], [0], [0], [1], [0, 0, 1, 1], [], []>} : vector<16x16xf32>, vector<16x8xf32>, vector<16x8xf32> -> vector<16x8xf32>
    %32 = tpu.reciprocal %30 : vector<16x1xf32> -> vector<16x1xf32>
    %33 = vector.broadcast %32 : vector<16x1xf32> to vector<16x8xf32>
    %34 = arith.mulf %31, %33 : vector<16x8xf32>
    %c0_9 = arith.constant 0 : index
    %c0_10 = arith.constant 0 : index
    %c0_11 = arith.constant 0 : index
    %35 = vector.load %arg6[%c0_9, %c0_10, %c0_11] : memref<1x1x8xf32, #tpu.memory_space<vmem>>, vector<1x1x8xf32>
    %36 = vector.shape_cast %35 : vector<1x1x8xf32> to vector<1x8xf32>
    %37 = vector.broadcast %36 : vector<1x8xf32> to vector<16x8xf32>
    %38 = arith.addf %34, %37 : vector<16x8xf32>
    %c0_i32_12 = arith.constant 0 : i32
    %39 = arith.cmpi eq, %arg1, %c0_i32_12 : i32
    %40 = arith.extui %39 : i1 to i32
    %c0_i32_13 = arith.constant 0 : i32
    %41 = arith.cmpi ne, %40, %c0_i32_13 : i32
    scf.if %41 {
      %c0_17 = arith.constant 0 : index
      %c0_18 = arith.constant 0 : index
      %48 = vector.load %arg7[%c0_17, %c0_18] : memref<16x8xf32, #tpu.memory_space<vmem>>, vector<16x8xf32>
      tpu.vector_store %arg7[%c0_17, %c0_18], %38 {strides = array<i32>} : memref<16x8xf32, #tpu.memory_space<vmem>>, vector<16x8xf32>,
    } else {
    }
    %c0_i32_14 = arith.constant 0 : i32
    %42 = arith.cmpi ne, %arg1, %c0_i32_14 : i32
    %43 = arith.extui %42 : i1 to i32
    %c0_i32_15 = arith.constant 0 : i32
    %44 = arith.cmpi ne, %43, %c0_i32_15 : i32
    scf.if %44 {
      %c0_17 = arith.constant 0 : index
      %c0_18 = arith.constant 0 : index
      %48 = vector.load %arg7[%c0_17, %c0_18] : memref<16x8xf32, #tpu.memory_space<vmem>>, vector<16x8xf32>
      %49 = arith.addf %48, %38 : vector<16x8xf32>
      %c0_19 = arith.constant 0 : index
      %c0_20 = arith.constant 0 : index
      %50 = vector.load %arg7[%c0_19, %c0_20] : memref<16x8xf32, #tpu.memory_space<vmem>>, vector<16x8xf32>
      tpu.vector_store %arg7[%c0_19, %c0_20], %49 {strides = array<i32>} : memref<16x8xf32, #tpu.memory_space<vmem>>, vector<16x8xf32>,
    } else {
    }
    %c3_i32 = arith.constant 3 : i32
    %45 = arith.cmpi eq, %arg1, %c3_i32 : i32
    %46 = arith.extui %45 : i1 to i32
    %c0_i32_16 = arith.constant 0 : i32
    %47 = arith.cmpi ne, %46, %c0_i32_16 : i32
    scf.if %47 {
      %c0_17 = arith.constant 0 : index
      %c0_18 = arith.constant 0 : index
      %48 = vector.load %arg7[%c0_17, %c0_18] : memref<16x8xf32, #tpu.memory_space<vmem>>, vector<16x8xf32>
      %cst_19 = arith.constant 2.500000e-01 : f32
      %49 = vector.broadcast %cst_19 : f32 to vector<16x8xf32>
      %50 = arith.mulf %48, %49 : vector<16x8xf32>
      %c0_20 = arith.constant 0 : index
      %c0_21 = arith.constant 0 : index
      %51 = vector.load %arg7[%c0_20, %c0_21] : memref<16x8xf32, #tpu.memory_space<vmem>>, vector<16x8xf32>
      tpu.vector_store %arg7[%c0_20, %c0_21], %50 {strides = array<i32>} : memref<16x8xf32, #tpu.memory_space<vmem>>, vector<16x8xf32>,
    } else {
    }
    return
  }
  func.func @transform_0(%arg0: i32, %arg1: i32) -> (i32, i32) {
    %c0_i32 = arith.constant 0 : i32
    %c0_i32_0 = arith.constant 0 : i32
    %c0_i32_1 = arith.constant 0 : i32
    return %c0_i32, %c0_i32_0 : i32, i32
  }
  func.func @transform_1(%arg0: i32, %arg1: i32) -> (i32, i32) {
    %c0_i32 = arith.constant 0 : i32
    %c0_i32_0 = arith.constant 0 : i32
    %c0_i32_1 = arith.constant 0 : i32
    return %c0_i32, %c0_i32_0 : i32, i32
  }
  func.func @transform_2(%arg0: i32, %arg1: i32) -> (i32, i32) {
    %c0_i32 = arith.constant 0 : i32
    %c0_i32_0 = arith.constant 0 : i32
    %c0_i32_1 = arith.constant 0 : i32
    return %c0_i32, %c0_i32_0 : i32, i32
  }
  func.func @transform_3(%arg0: i32, %arg1: i32) -> (i32, i32) {
    %c0_i32 = arith.constant 0 : i32
    %c0_i32_0 = arith.constant 0 : i32
    return %arg0, %c0_i32 : i32, i32
  }
  func.func @transform_4(%arg0: i32, %arg1: i32) -> (i32, i32, i32) {
    %c0_i32 = arith.constant 0 : i32
    %c0_i32_0 = arith.constant 0 : i32
    %c0_i32_1 = arith.constant 0 : i32
    return %arg1, %c0_i32, %c0_i32_0 : i32, i32, i32
  }
  func.func @transform_5(%arg0: i32, %arg1: i32) -> (i32, i32) {
    %c0_i32 = arith.constant 0 : i32
    %c0_i32_0 = arith.constant 0 : i32
    return %arg0, %c0_i32 : i32, i32
  }
}

</mosaic_0001>

<llo_original>
// kernel: tpu_custom_call.1
$region0: #{tpu_custom_call.1}
  #allocation0 [shape = 'u32[]', space=smem, size = 0x4, offset = 0x4, fixed_abs, tag = 'smem constant byte address 0x4 - core index']
  #allocation1 [shape = 'u32[144,128]{1,0:T(1,128)}', space=vmem, size = 0x12000, scoped, tag = 'internal scratch']
  #allocation2 [shape = 'f32[4,16,9]{2,1,0:T(8,128)}', space=vmem, size = 0x8000, scoped, tag = 'scratch operand']
  #allocation3 [shape = 'f32[4,1,16]{2,1,0:T(1,128)}', space=vmem, size = 0x800, scoped, tag = 'scratch operand']
  %s0 = inlined_call_operand.vmem [shape: f32[16,8], index: 0, kind: input, shape index: {}]
  %s1 = inlined_call_operand.vmem [shape: f32[8,36], index: 1, kind: input, shape index: {}]
  %s2 = inlined_call_operand.vmem [shape: f32[4,8], index: 2, kind: input, shape index: {}]
  %s3 = inlined_call_operand.vmem [shape: bf16[16,16], index: 3, kind: input, shape index: {}]
  %s4 = inlined_call_operand.vmem [shape: f32[4,1,8], index: 4, kind: input, shape index: {}]
  %s5 = inlined_call_operand.vmem [shape: f32[16,8], index: 5, kind: output, shape index: {}]
  %s6 = sld [smem:[#allocation0]]
  $region69: #{tpu_custom_call.1} parent=0
    _
  %s8 = ssub.s32 1, %s6
  %s9 = scalar_select 0, %s8, %s6
  loop: start=0, step=1, limit=6
  $region2: #{tpu_custom_call.1} parent=0 // loop_pre_header
    _
  $region3: #{tpu_custom_call.1} parent=0 // loop_header
    %s11 = sphi 0, %s15
    %p12 = scmp.ge.s32.totalorder %s11, 6
    %s18 = sphi 0, %s30
    %s19 = sphi 0, %s26
    %s20 = sphi 0, %s18
    %s21 = sphi 0, %s19
    %s22 = sphi 0, %s20
    %s23 = sphi 0, %s21
    %s31 = sphi 0, %s31
    %s33 = sphi 0, %s31
    %s34 = sphi 0, %s33
    %s48 = sphi 0, %s34
    %s52 = sphi 0, %s52
    %s54 = sphi 0, %s52
    %s55 = sphi 0, %s54
    %s69 = sphi 0, %s55
    %s73 = sphi 0, %s73
    %s75 = sphi 0, %s73
    %s76 = sphi 0, %s75
    %s90 = sphi 0, %s76
    %s96 = sphi 0, %s98
    %s99 = sphi 0, %s96
    %s100 = sphi 0, %s99
    %s116 = sphi 0, %s100
    %s122 = sphi 0, %s124
    %s125 = sphi 0, %s122
    %s126 = sphi 0, %s125
    %s142 = sphi 0, %s126
    %s148 = sphi 0, %s150
    %s151 = sphi 0, %s148
    %s152 = sphi 0, %s151
    %s168 = sphi 0, %s152
  $region4: #{tpu_custom_call.1} parent=0 // loop_header_branch
    %14 = sbr.rel (%p12) target = $region8
  $region5: #{tpu_custom_call.1} parent=0 // loop_body
    %s16 = ssub.s32 %s11, 1
    %s17 = ssub.s32 %s11, 2
    %s24 = sadd.s32 1, %s19
    %p25 = scmp.ge.s32.totalorder %s24, 4
    %s26 = scalar_select %p25, 0, %s24
    %s27 = sadd.s32 1, %s18
    %s28 = scalar_select %p25, %s27, %s18
    %p29 = scmp.ge.s32.totalorder %s28, 1
    %s30 = scalar_select %p29, 0, %s28
    %s32 = sadd.s32 %s31, 1
    %p35 = scmp.eq.s32.totalorder %s11, 3
    %p36 = scmp.ne.s32.totalorder %s31, %s33
    %p37 = scmp.eq.s32.totalorder %s11, 0
    %p38 = por %p36, %p37
    %p39 = scmp.ne.s32.totalorder %s31, %s33
    %p40 = scmp.eq.s32.totalorder %s16, 3
    %p41 = por %p39, %p40
    %p42 = scmp.ne.s32.totalorder %s33, %s34
    %p43 = scmp.eq.s32.totalorder %s16, 0
    %p44 = por %p42, %p43
    %p45 = scmp.ne.s32.totalorder %s33, %s34
    %p46 = scmp.eq.s32.totalorder %s17, 3
    %p47 = por %p45, %p46
    %p49 = scmp.ne.s32.totalorder %s34, %s48
    %p50 = scmp.eq.s32.totalorder %s17, 0
    %p51 = por %p49, %p50
    %s53 = sadd.s32 %s52, 1
    %p56 = scmp.eq.s32.totalorder %s11, 3
    %p57 = scmp.ne.s32.totalorder %s52, %s54
    %p58 = scmp.eq.s32.totalorder %s11, 0
    %p59 = por %p57, %p58
    %p60 = scmp.ne.s32.totalorder %s52, %s54
    %p61 = scmp.eq.s32.totalorder %s16, 3
    %p62 = por %p60, %p61
    %p63 = scmp.ne.s32.totalorder %s54, %s55
    %p64 = scmp.eq.s32.totalorder %s16, 0
    %p65 = por %p63, %p64
    %p66 = scmp.ne.s32.totalorder %s54, %s55
    %p67 = scmp.eq.s32.totalorder %s17, 3
    %p68 = por %p66, %p67
    %p70 = scmp.ne.s32.totalorder %s55, %s69
    %p71 = scmp.eq.s32.totalorder %s17, 0
    %p72 = por %p70, %p71
    %s74 = sadd.s32 %s73, 1
    %p77 = scmp.eq.s32.totalorder %s11, 3
    %p78 = scmp.ne.s32.totalorder %s73, %s75
    %p79 = scmp.eq.s32.totalorder %s11, 0
    %p80 = por %p78, %p79
    %p81 = scmp.ne.s32.totalorder %s73, %s75
    %p82 = scmp.eq.s32.totalorder %s16, 3
    %p83 = por %p81, %p82
    %p84 = scmp.ne.s32.totalorder %s75, %s76
    %p85 = scmp.eq.s32.totalorder %s16, 0
    %p86 = por %p84, %p85
    %p87 = scmp.ne.s32.totalorder %s75, %s76
    %p88 = scmp.eq.s32.totalorder %s17, 3
    %p89 = por %p87, %p88
    %p91 = scmp.ne.s32.totalorder %s76, %s90
    %p92 = scmp.eq.s32.totalorder %s17, 0
    %p93 = por %p91, %p92
    %s94 = ssub.s32 %s18, %s30
    %p95 = scmp.eq.s32.totalorder %s94, 0
    %s97 = sadd.s32 %s96, 1
    %s98 = scalar_select %p95, %s96, %s97
    %p101 = pneg %p95
    %p102 = scmp.eq.s32.totalorder %s11, 3
    %p103 = por %p101, %p102
    %p104 = scmp.ne.s32.totalorder %s96, %s99
    %p105 = scmp.eq.s32.totalorder %s11, 0
    %p106 = por %p104, %p105
    %p107 = scmp.ne.s32.totalorder %s96, %s99
    %p108 = scmp.eq.s32.totalorder %s16, 3
    %p109 = por %p107, %p108
    %p110 = scmp.ne.s32.totalorder %s99, %s100
    %p111 = scmp.eq.s32.totalorder %s16, 0
    %p112 = por %p110, %p111
    %p113 = scmp.ne.s32.totalorder %s99, %s100
    %p114 = scmp.eq.s32.totalorder %s17, 3
    %p115 = por %p113, %p114
    %p117 = scmp.ne.s32.totalorder %s100, %s116
    %p118 = scmp.eq.s32.totalorder %s17, 0
    %p119 = por %p117, %p118
    %s120 = ssub.s32 %s19, %s26
    %p121 = scmp.eq.s32.totalorder %s120, 0
    %s123 = sadd.s32 %s122, 1
    %s124 = scalar_select %p121, %s122, %s123
    %p127 = pneg %p121
    %p128 = scmp.eq.s32.totalorder %s11, 3
    %p129 = por %p127, %p128
    %p130 = scmp.ne.s32.totalorder %s122, %s125
    %p131 = scmp.eq.s32.totalorder %s11, 0
    %p132 = por %p130, %p131
    %p133 = scmp.ne.s32.totalorder %s122, %s125
    %p134 = scmp.eq.s32.totalorder %s16, 3
    %p135 = por %p133, %p134
    %p136 = scmp.ne.s32.totalorder %s125, %s126
    %p137 = scmp.eq.s32.totalorder %s16, 0
    %p138 = por %p136, %p137
    %p139 = scmp.ne.s32.totalorder %s125, %s126
    %p140 = scmp.eq.s32.totalorder %s17, 3
    %p141 = por %p139, %p140
    %p143 = scmp.ne.s32.totalorder %s126, %s142
    %p144 = scmp.eq.s32.totalorder %s17, 0
    %p145 = por %p143, %p144
    %s146 = ssub.s32 %s18, %s30
    %p147 = scmp.eq.s32.totalorder %s146, 0
    %s149 = sadd.s32 %s148, 1
    %s150 = scalar_select %p147, %s148, %s149
    %p153 = pneg %p147
    %p154 = scmp.eq.s32.totalorder %s11, 3
    %p155 = por %p153, %p154
    %p156 = scmp.ne.s32.totalorder %s148, %s151
    %p157 = scmp.eq.s32.totalorder %s11, 0
    %p158 = por %p156, %p157
    %p159 = scmp.ne.s32.totalorder %s148, %s151
    %p160 = scmp.eq.s32.totalorder %s16, 3
    %p161 = por %p159, %p160
    %p162 = scmp.ne.s32.totalorder %s151, %s152
    %p163 = scmp.eq.s32.totalorder %s16, 0
    %p164 = por %p162, %p163
    %p165 = scmp.ne.s32.totalorder %s151, %s152
    %p166 = scmp.eq.s32.totalorder %s17, 3
    %p167 = por %p165, %p166
    %p169 = scmp.ne.s32.totalorder %s152, %s168
    %p170 = scmp.eq.s32.totalorder %s17, 0
    %p171 = por %p169, %p170
    %p172 = scmp.le.s32.totalorder 1, %s11
    %p173 = scmp.lt.s32.totalorder %s11, 5
    %p174 = pnand %p172, %p173
    %p175 = pneg %p174
    // Predicated region
    $region9: #{tpu_custom_call.1} parent=5 // pred_check
      _
    $region10: #{tpu_custom_call.1} parent=5 // pred_check_branch
      %177 = sbr.rel (%p174) target = $region12
    $region11: #{tpu_custom_call.1} parent=5 // pred_region
      %s178 = ssub.s32 %s11, 1
      // Predicated region
      $region13: #{tpu_custom_call.1} parent=11 // pred_check
        %p179 = pneg %p44
      $region14: #{tpu_custom_call.1} parent=11 // pred_check_branch
        %181 = sbr.rel (%p179) target = $region16
      $region15: #{tpu_custom_call.1} parent=11 // pred_region
        _
      $region16: #{tpu_custom_call.1} parent=11 // pred_fallthru
        _
      // Predicated region
      $region17: #{tpu_custom_call.1} parent=11 // pred_check
        %p182 = pneg %p65
      $region18: #{tpu_custom_call.1} parent=11 // pred_check_branch
        %184 = sbr.rel (%p182) target = $region20
      $region19: #{tpu_custom_call.1} parent=11 // pred_region
        _
      $region20: #{tpu_custom_call.1} parent=11 // pred_fallthru
        _
      // Predicated region
      $region21: #{tpu_custom_call.1} parent=11 // pred_check
        %p185 = pneg %p86
      $region22: #{tpu_custom_call.1} parent=11 // pred_check_branch
        %187 = sbr.rel (%p185) target = $region24
      $region23: #{tpu_custom_call.1} parent=11 // pred_region
        _
      $region24: #{tpu_custom_call.1} parent=11 // pred_fallthru
        _
      // Predicated region
      $region25: #{tpu_custom_call.1} parent=11 // pred_check
        %p188 = pneg %p112
      $region26: #{tpu_custom_call.1} parent=11 // pred_check_branch
        %190 = sbr.rel (%p188) target = $region28
      $region27: #{tpu_custom_call.1} parent=11 // pred_region
        %s191 = smul.u32 2, %s20
        %p192 = scmp.lt.s32.totalorder %s191, 1
        %s193 = scalar_select %p192, %s191, 1
        %s194 = smul.addr %s193, 4
        %s195 = scalar_lea.vmem %s3, %s194
        %s196 = smul.u32 2, %s20
      $region28: #{tpu_custom_call.1} parent=11 // pred_fallthru
        _
    $region12: #{tpu_custom_call.1} parent=5 // pred_fallthru
      _
    %p197 = scmp.lt.s32.totalorder %s11, 4
    // Predicated region
    $region29: #{tpu_custom_call.1} parent=5 // pred_check
      %p198 = pneg %p197
    $region30: #{tpu_custom_call.1} parent=5 // pred_check_branch
      %200 = sbr.rel (%p198) target = $region32
    $region31: #{tpu_custom_call.1} parent=5 // pred_region
      // Predicated region
      $region33: #{tpu_custom_call.1} parent=31 // pred_check
        %p201 = pneg %p132
      $region34: #{tpu_custom_call.1} parent=31 // pred_check_branch
        %203 = sbr.rel (%p201) target = $region36
      $region35: #{tpu_custom_call.1} parent=31 // pred_region
        %p204 = scmp.lt.s32.totalorder %s19, 3
        %s205 = scalar_select %p204, %s19, 3
        %s206 = scalar_lea.vmem %s4, %s205
      $region36: #{tpu_custom_call.1} parent=31 // pred_fallthru
        _
    $region32: #{tpu_custom_call.1} parent=5 // pred_fallthru
      _
    %p207 = scmp.le.s32.totalorder 1, %s11
    %p208 = scmp.lt.s32.totalorder %s11, 5
    %p209 = pnand %p207, %p208
    %p210 = pneg %p209
    // Predicated region
    $region37: #{tpu_custom_call.1} parent=5 // pred_check
      _
    $region38: #{tpu_custom_call.1} parent=5 // pred_check_branch
      %212 = sbr.rel (%p209) target = $region40
    $region39: #{tpu_custom_call.1} parent=5 // pred_region
      %s213 = ssub.s32 %s11, 1
      %p214 = pneg %p44
      %p215 = pneg %p41
      %p216 = pneg %p65
      %p217 = pneg %p62
      %p218 = pneg %p86
      %p219 = pneg %p83
      %s220 = smul.u32 2, %s20
      %p221 = scmp.lt.s32.totalorder %s220, 1
      %s222 = scalar_select %p221, %s220, 1
      %s223 = smul.addr %s222, 4
      %s224 = scalar_lea.vmem %s3, %s223
      %p225 = pneg %p112
      %p226 = pneg %p109
      %p227 = scmp.lt.s32.totalorder %s21, 3
      %s228 = scalar_select %p227, %s21, 3
      %s229 = scalar_lea.vmem %s4, %s228
      %p230 = pneg %p138
      %p231 = pneg %p135
      %p232 = pneg %p164
      %p233 = pneg %p161
      %s234 = smul.u32 2, %s20
      %p235 = scmp.lt.s32.totalorder %s234, 1
      %s236 = scalar_select %p235, %s234, 1
      %s237 = smul.addr %s236, 8
      %s238 = scalar_lea.vmem %s5, %s237
      %s239 = smul.u32 2, %s20
      %p240 = scmp.lt.s32.totalorder %s239, 1
      %s241 = scalar_select %p240, %s239, 1
      %s242 = smul.addr %s241, 4
      %s243 = scalar_lea.vmem %s3, %s242
      %s244 = smul.u32 2, %s20
      %p245 = scmp.lt.s32.totalorder %s21, 3
      %s246 = scalar_select %p245, %s21, 3
      %s247 = scalar_lea.vmem %s4, %s246
      %s248 = smul.u32 2, %s20
      %p249 = scmp.lt.s32.totalorder %s248, 1
      %s250 = scalar_select %p249, %s248, 1
      %s251 = smul.addr %s250, 8
      %s252 = scalar_lea.vmem %s5, %s251
      %s253 = smul.u32 2, %s20
      %p254 = scmp.eq.s32.totalorder %s21, 0
      // Predicated region
      $region41: #{tpu_custom_call.1} parent=39 // pred_check
        %p255 = pneg %p254
      $region42: #{tpu_custom_call.1} parent=39 // pred_check_branch
        %257 = sbr.rel (%p255) target = $region44
      $region43: #{tpu_custom_call.1} parent=39 // pred_region
        %v258 = vld [vmem:[%s0] sm:$0xff]
        %v259 = vld [vmem:[%s0 + $0x8] sm:$0xff]
        %v260 = vld [vmem:[%s1] sm:$0xff]
        %vm261 = vcmask 64512
        %v263 = vsel %vm261, %v258, 0
        %v266 = vsel %vm261, %v259, 0
        %268 = vmatprep.subr.mxu0 0.0
        %269 = vmatpush1.msra.mxu0 %v260
        %270 = vmatprep.subr.mxu0 0.0
        %271 = vmatpush1.msra.mxu0 0.0
        %272 = vmatprep.subr.mxu0 0.0
        %273 = vmatpush1.msra.mxu0 0.0
        %274 = vmatprep.subr.mxu0 0.0
        %275 = vmatpush1.msra.mxu0 0.0
        %276 = vmatprep.subr.mxu0 0.0
        %277 = vmatpush1.msra.mxu0 0.0
        %278 = vmatprep.subr.mxu0 0.0
        %279 = vmatpush1.msra.mxu0 0.0
        %280 = vmatprep.subr.mxu0 0.0
        %281 = vmatpush1.msra.mxu0 0.0
        %282 = vmatprep.subr.mxu0 0.0
        %283 = vmatpush1.msra.mxu0 0.0
        %284 = vmatprep.subr.mxu0 0.0
        %285 = vmatpush1.msra.mxu0 0.0
        %286 = vmatprep.subr.mxu0 0.0
        %287 = vmatpush1.msra.mxu0 0.0
        %288 = vmatprep.subr.mxu0 0.0
        %289 = vmatpush1.msra.mxu0 0.0
        %290 = vmatprep.subr.mxu0 0.0
        %291 = vmatpush1.msra.mxu0 0.0
        %292 = vmatprep.subr.mxu0 0.0
        %293 = vmatpush1.msra.mxu0 0.0
        %294 = vmatprep.subr.mxu0 0.0
        %295 = vmatpush1.msra.mxu0 0.0
        %296 = vmatprep.subr.mxu0 0.0
        %297 = vmatpush1.msra.mxu0 0.0
        %298 = vmatprep.subr.mxu0 0.0
        %299 = vmatpush1.msra.mxu0 0.0
        %300 = vmatprep.subr.mxu0 0.0
        %301 = vmatpush1.msra.mxu0 0.0
        %302 = vmatprep.subr.mxu0 0.0
        %303 = vmatpush1.msra.mxu0 0.0
        %304 = vmatprep.subr.mxu0 0.0
        %305 = vmatpush1.msra.mxu0 0.0
        %306 = vmatprep.subr.mxu0 0.0
        %307 = vmatpush1.msra.mxu0 0.0
        %308 = vmatprep.subr.mxu0 0.0
        %309 = vmatpush1.msra.mxu0 0.0
        %310 = vmatprep.subr.mxu0 0.0
        %311 = vmatpush1.msra.mxu0 0.0
        %312 = vmatprep.subr.mxu0 0.0
        %313 = vmatpush1.msra.mxu0 0.0
        %314 = vmatprep.subr.mxu0 0.0
        %315 = vmatpush1.msra.mxu0 0.0
        %316 = vmatprep.subr.mxu0 0.0
        %317 = vmatpush1.msra.mxu0 0.0
        %318 = vmatprep.subr.mxu0 0.0
        %319 = vmatpush1.msra.mxu0 0.0
        %320 = vmatprep.subr.mxu0 0.0
        %321 = vmatpush1.msra.mxu0 0.0
        %322 = vmatprep.subr.mxu0 0.0
        %323 = vmatpush1.msra.mxu0 0.0
        %324 = vmatprep.subr.mxu0 0.0
        %325 = vmatpush1.msra.mxu0 0.0
        %326 = vmatprep.subr.mxu0 0.0
        %327 = vmatpush1.msra.mxu0 0.0
        %328 = vmatprep.subr.mxu0 0.0
        %329 = vmatpush1.msra.mxu0 0.0
        %330 = vmatprep.subr.mxu0 0.0
        %331 = vmatpush1.msra.mxu0 0.0
        %332 = vmatprep.mubr.f32.mxu0 0.0
        %333 = vmatmul.mubr.f32.gmra.mrb[0].mxu0 %v263
        %v334 = vpop.f32.mrb[0].mxu0
        %v335 = vadd.f32 0.0, %v334
        %v336 = vpop.f32.mrb[0].mxu0
        %337 = vmatprep.mubr.f32.mxu0 0.0
        %338 = vmatmul.mubr.f32.gmra.mrb[0].mxu0 %v266
        %v339 = vpop.f32.mrb[0].mxu0
        %v340 = vadd.f32 0.0, %v339
        %v341 = vpop.f32.mrb[0].mxu0
        %342 = vdwg.mxu0
        %v343 = vld [vmem:[%s2] sm:$0xf]
        %v345 = vsel %vm261, %v343, 0
        %347 = vmatprep.subr.mxu0 0.0
        %348 = vmatpush1.xpose.msra.mxu0 %v263
        %349 = vmatprep.subr.mxu0 0.0
        %350 = vmatpush1.xpose.msra.mxu0 %v266
        %351 = vmatprep.subr.mxu0 0.0
        %352 = vmatpush1.xpose.msra.mxu0 0.0
        %353 = vmatprep.subr.mxu0 0.0
        %354 = vmatpush1.xpose.msra.mxu0 0.0
        %355 = vmatprep.subr.mxu0 0.0
        %356 = vmatpush1.xpose.msra.mxu0 0.0
        %357 = vmatprep.subr.mxu0 0.0
        %358 = vmatpush1.xpose.msra.mxu0 0.0
        %359 = vmatprep.subr.mxu0 0.0
        %360 = vmatpush1.xpose.msra.mxu0 0.0
        %361 = vmatprep.subr.mxu0 0.0
        %362 = vmatpush1.xpose.msra.mxu0 0.0
        %363 = vmatprep.subr.mxu0 0.0
        %364 = vmatpush1.xpose.msra.mxu0 0.0
        %365 = vmatprep.subr.mxu0 0.0
        %366 = vmatpush1.xpose.msra.mxu0 0.0
        %367 = vmatprep.subr.mxu0 0.0
        %368 = vmatpush1.xpose.msra.mxu0 0.0
        %369 = vmatprep.subr.mxu0 0.0
        %370 = vmatpush1.xpose.msra.mxu0 0.0
        %371 = vmatprep.subr.mxu0 0.0
        %372 = vmatpush1.xpose.msra.mxu0 0.0
        %373 = vmatprep.subr.mxu0 0.0
        %374 = vmatpush1.xpose.msra.mxu0 0.0
        %375 = vmatprep.subr.mxu0 0.0
        %376 = vmatpush1.xpose.msra.mxu0 0.0
        %377 = vmatprep.subr.mxu0 0.0
        %378 = vmatpush1.xpose.msra.mxu0 0.0
        %379 = vmatprep.subr.mxu0 0.0
        %380 = vmatpush1.xpose.msra.mxu0 0.0
        %381 = vmatprep.subr.mxu0 0.0
        %382 = vmatpush1.xpose.msra.mxu0 0.0
        %383 = vmatprep.subr.mxu0 0.0
        %384 = vmatpush1.xpose.msra.mxu0 0.0
        %385 = vmatprep.subr.mxu0 0.0
        %386 = vmatpush1.xpose.msra.mxu0 0.0
        %387 = vmatprep.subr.mxu0 0.0
        %388 = vmatpush1.xpose.msra.mxu0 0.0
        %389 = vmatprep.subr.mxu0 0.0
        %390 = vmatpush1.xpose.msra.mxu0 0.0
        %391 = vmatprep.subr.mxu0 0.0
        %392 = vmatpush1.xpose.msra.mxu0 0.0
        %393 = vmatprep.subr.mxu0 0.0
        %394 = vmatpush1.xpose.msra.mxu0 0.0
        %395 = vmatprep.subr.mxu0 0.0
        %396 = vmatpush1.xpose.msra.mxu0 0.0
        %397 = vmatprep.subr.mxu0 0.0
        %398 = vmatpush1.xpose.msra.mxu0 0.0
        %399 = vmatprep.subr.mxu0 0.0
        %400 = vmatpush1.xpose.msra.mxu0 0.0
        %401 = vmatprep.subr.mxu0 0.0
        %402 = vmatpush1.xpose.msra.mxu0 0.0
        %403 = vmatprep.subr.mxu0 0.0
        %404 = vmatpush1.xpose.msra.mxu0 0.0
        %405 = vmatprep.subr.mxu0 0.0
        %406 = vmatpush1.xpose.msra.mxu0 0.0
        %407 = vmatprep.subr.mxu0 0.0
        %408 = vmatpush1.xpose.msra.mxu0 0.0
        %409 = vmatprep.subr.mxu0 0.0
        %410 = vmatpush1.xpose.msra.mxu0 0.0
        %411 = vmatprep.mubr.f32.mxu0 0.0
        %412 = vmatmul.mubr.f32.gmra.mrb[0].mxu0 %v345
        %v413 = vpop.f32.mrb[0].mxu0
        %v414 = vadd.f32 0.0, %v413
        %v415 = vpop.f32.mrb[0].mxu0
        %416 = vdwg.mxu0
        %vm417 = vcmask 72704
        %418 = vst.msk [vmem:[#allocation2] sm:$0xff] %vm417, %v335
        %419 = vst.msk [vmem:[#allocation2 + $0x8] sm:$0xff] %vm417, %v340
        %vm420 = vcmask 122880
        %421 = vst.msk [vmem:[#allocation3] sm:$0x1] %vm420, %v414
        %424 = vrot.lane.b32.xlu0 %v335, 119
        %v425 = vpop.permute.xlu0 %424
        %426 = vrot.lane.b32.xlu0 %v340, 119
        %v427 = vpop.permute.xlu0 %426
        %s430 = scalar_lea.vmem [#allocation2], 16
        %431 = vst.msk [vmem:[%s430] sm:$0xff] %vm417, %v425
        %432 = vst.msk [vmem:[%s430 + $0x8] sm:$0xff] %vm417, %v427
        %s433 = scalar_lea.vmem [#allocation3], 1
        %vm434 = vcmask 123905
        %435 = vst.msk [vmem:[%s433 - $0x1] sm:$0x2] %vm434, %v414
        %436 = vrot.lane.b32.xlu0 %v335, 110
        %v437 = vpop.permute.xlu0 %436
        %438 = vrot.lane.b32.xlu0 %v340, 110
        %v439 = vpop.permute.xlu0 %438
        %s442 = scalar_lea.vmem [#allocation2], 32
        %443 = vst.msk [vmem:[%s442] sm:$0xff] %vm417, %v437
        %444 = vst.msk [vmem:[%s442 + $0x8] sm:$0xff] %vm417, %v439
        %s445 = scalar_lea.vmem [#allocation3], 2
        %vm446 = vcmask 124930
        %447 = vst.msk [vmem:[%s445 - $0x2] sm:$0x4] %vm446, %v414
        %448 = vrot.lane.b32.xlu0 %v335, 101
        %v449 = vpop.permute.xlu0 %448
        %450 = vrot.lane.b32.xlu0 %v340, 101
        %v451 = vpop.permute.xlu0 %450
        %s454 = scalar_lea.vmem [#allocation2], 48
        %455 = vst.msk [vmem:[%s454] sm:$0xff] %vm417, %v449
        %456 = vst.msk [vmem:[%s454 + $0x8] sm:$0xff] %vm417, %v451
        %s457 = scalar_lea.vmem [#allocation3], 3
        %vm458 = vcmask 125955
        %459 = vst.msk [vmem:[%s457 - $0x3] sm:$0x8] %vm458, %v414
      $region44: #{tpu_custom_call.1} parent=39 // pred_fallthru
        _
      %s460 = smul.u32 %s20, 16
      %s461 = smul.u32 %s21, 16
      %s462 = scalar_lea.vmem [#allocation2], %s461
      %v463 = vld [vmem:[%s462] sm:$0xff]
      %v464 = vld [vmem:[%s462 + $0x8] sm:$0xff]
      %s465 = sadd.s32 %s460, %s461
      %s466 = scalar_lea.vmem [#allocation2], %s465
      %v467 = vld [vmem:[%s466] sm:$0xff]
      %v468 = vld [vmem:[%s466 + $0x8] sm:$0xff]
      %s469 = scalar_lea.vmem [#allocation3], %s21
      %v470 = vld [vmem:[%s469] sm:$0x1]
      %472 = vset.pattern.permute.xlu0 8
      %473 = vperm.xlu0 %472, %v467
      %v474 = vpop.permute.xlu0 %473
      %477 = vset.pattern.permute.xlu0 8
      %478 = vperm.xlu0 %477, %v468
      %v479 = vpop.permute.xlu0 %478
      %v482 = vlaneseq
      %v483 = vshrl.u32 %v482, 7
      %v484 = vsub.s32 0, %v483
      %v485 = vrot.slane %v470, %v484
      %v487 = vadd.f32 %v474, %v485
      %v488 = vadd.f32 %v479, %v485
      %v489 = vmul.f32 %v487, 0.2
      %v490 = vmul.f32 %v488, 0.2
      %v491 = vmax.f32 %v487, %v489
      %v492 = vmax.f32 %v488, %v490
      %v493 = vld [vmem:[%s243] sm:$0xf]
      %v494 = vld [vmem:[%s243 + $0x4] sm:$0xf]
      %v495 = vunpack.c.l.bf16 %v493
      %v496 = vunpack.c.l.bf16 %v494
      %v497 = vadd.f32 %v491, %v495
      %v498 = vadd.f32 %v492, %v496
      %vm499 = vcmask 130048
      %v500 = vsel %vm499, %v497, -inf
      %501 = vmax.xlane.f32.xlu0 %v500
      %v502 = vpop.xlane.xlu0 %501
      %v503 = vsel %vm499, %v498, -inf
      %504 = vmax.xlane.f32.xlu0 %v503
      %v505 = vpop.xlane.xlu0 %504
      %v506 = vsub.f32 %v497, %v502
      %v507 = vsub.f32 %v498, %v505
      %v508 = vmul.f32 %v506, 1.442695
      %v509 = vpow.pop %v508
      %v510 = vmul.f32 %v507, 1.442695
      %v511 = vpow.pop %v510
      %v512 = vsel %vm499, %v509, 0.0
      %513 = vadd.xlane.f32.xlu0 %v512
      %v514 = vpop.xlane.xlu0 %513
      %v515 = vsel %vm499, %v511, 0.0
      %516 = vadd.xlane.f32.xlu0 %v515
      %v517 = vpop.xlane.xlu0 %516
      %v519 = vsel %vm499, %v509, 0
      %v522 = vsel %vm499, %v511, 0
      %524 = vmatprep.subr.mxu0 0.0
      %525 = vmatpush1.msra.mxu0 %v463
      %526 = vmatprep.subr.mxu0 0.0
      %527 = vmatpush1.msra.mxu0 %v464
      %528 = vmatprep.subr.mxu0 0.0
      %529 = vmatpush1.msra.mxu0 0.0
      %530 = vmatprep.subr.mxu0 0.0
      %531 = vmatpush1.msra.mxu0 0.0
      %532 = vmatprep.subr.mxu0 0.0
      %533 = vmatpush1.msra.mxu0 0.0
      %534 = vmatprep.subr.mxu0 0.0
      %535 = vmatpush1.msra.mxu0 0.0
      %536 = vmatprep.subr.mxu0 0.0
      %537 = vmatpush1.msra.mxu0 0.0
      %538 = vmatprep.subr.mxu0 0.0
      %539 = vmatpush1.msra.mxu0 0.0
      %540 = vmatprep.subr.mxu0 0.0
      %541 = vmatpush1.msra.mxu0 0.0
      %542 = vmatprep.subr.mxu0 0.0
      %543 = vmatpush1.msra.mxu0 0.0
      %544 = vmatprep.subr.mxu0 0.0
      %545 = vmatpush1.msra.mxu0 0.0
      %546 = vmatprep.subr.mxu0 0.0
      %547 = vmatpush1.msra.mxu0 0.0
      %548 = vmatprep.subr.mxu0 0.0
      %549 = vmatpush1.msra.mxu0 0.0
      %550 = vmatprep.subr.mxu0 0.0
      %551 = vmatpush1.msra.mxu0 0.0
      %552 = vmatprep.subr.mxu0 0.0
      %553 = vmatpush1.msra.mxu0 0.0
      %554 = vmatprep.subr.mxu0 0.0
      %555 = vmatpush1.msra.mxu0 0.0
      %556 = vmatprep.subr.mxu0 0.0
      %557 = vmatpush1.msra.mxu0 0.0
      %558 = vmatprep.subr.mxu0 0.0
      %559 = vmatpush1.msra.mxu0 0.0
      %560 = vmatprep.subr.mxu0 0.0
      %561 = vmatpush1.msra.mxu0 0.0
      %562 = vmatprep.subr.mxu0 0.0
      %563 = vmatpush1.msra.mxu0 0.0
      %564 = vmatprep.subr.mxu0 0.0
      %565 = vmatpush1.msra.mxu0 0.0
      %566 = vmatprep.subr.mxu0 0.0
      %567 = vmatpush1.msra.mxu0 0.0
      %568 = vmatprep.subr.mxu0 0.0
      %569 = vmatpush1.msra.mxu0 0.0
      %570 = vmatprep.subr.mxu0 0.0
      %571 = vmatpush1.msra.mxu0 0.0
      %572 = vmatprep.subr.mxu0 0.0
      %573 = vmatpush1.msra.mxu0 0.0
      %574 = vmatprep.subr.mxu0 0.0
      %575 = vmatpush1.msra.mxu0 0.0
      %576 = vmatprep.subr.mxu0 0.0
      %577 = vmatpush1.msra.mxu0 0.0
      %578 = vmatprep.subr.mxu0 0.0
      %579 = vmatpush1.msra.mxu0 0.0
      %580 = vmatprep.subr.mxu0 0.0
      %581 = vmatpush1.msra.mxu0 0.0
      %582 = vmatprep.subr.mxu0 0.0
      %583 = vmatpush1.msra.mxu0 0.0
      %584 = vmatprep.subr.mxu0 0.0
      %585 = vmatpush1.msra.mxu0 0.0
      %586 = vmatprep.subr.mxu0 0.0
      %587 = vmatpush1.msra.mxu0 0.0
      %588 = vmatprep.mubr.f32.mxu0 0.0
      %589 = vmatmul.mubr.f32.gmra.mrb[0].mxu0 %v519
      %v590 = vpop.f32.mrb[0].mxu0
      %v591 = vadd.f32 0.0, %v590
      %v592 = vpop.f32.mrb[0].mxu0
      %593 = vmatprep.mubr.f32.mxu0 0.0
      %594 = vmatmul.mubr.f32.gmra.mrb[0].mxu0 %v522
      %v595 = vpop.f32.mrb[0].mxu0
      %v596 = vadd.f32 0.0, %v595
      %v597 = vpop.f32.mrb[0].mxu0
      %598 = vdwg.mxu0
      %v599 = vrcp.pop %v514
      %v600 = vrcp.pop %v517
      %v601 = vmul.f32 %v591, %v599
      %v602 = vmul.f32 %v596, %v600
      %v603 = vld [vmem:[%s247] sm:$0x1]
      %v605 = vlaneseq
      %v606 = vshrl.u32 %v605, 7
      %v607 = vsub.s32 0, %v606
      %v608 = vrot.slane %v603, %v607
      %v610 = vadd.f32 %v601, %v608
      %v611 = vadd.f32 %v602, %v608
      // Predicated region
      $region45: #{tpu_custom_call.1} parent=39 // pred_check
        %p612 = pneg %p254
      $region46: #{tpu_custom_call.1} parent=39 // pred_check_branch
        %614 = sbr.rel (%p612) target = $region48
      $region47: #{tpu_custom_call.1} parent=39 // pred_region
        %vm615 = vcmask 64512
        %616 = vst.msk [vmem:[%s252] sm:$0xff] %vm615, %v610
        %617 = vst.msk [vmem:[%s252 + $0x8] sm:$0xff] %vm615, %v611
      $region48: #{tpu_custom_call.1} parent=39 // pred_fallthru
        _
      %p618 = scmp.ne.s32.totalorder %s21, 0
      // Predicated region
      $region49: #{tpu_custom_call.1} parent=39 // pred_check
        %p619 = pneg %p618
      $region50: #{tpu_custom_call.1} parent=39 // pred_check_branch
        %621 = sbr.rel (%p619) target = $region52
      $region51: #{tpu_custom_call.1} parent=39 // pred_region
        %v622 = vld [vmem:[%s252] sm:$0xff]
        %v623 = vld [vmem:[%s252 + $0x8] sm:$0xff]
        %v624 = vadd.f32 %v622, %v610
        %v625 = vadd.f32 %v623, %v611
        %vm626 = vcmask 64512
        %627 = vst.msk [vmem:[%s252] sm:$0xff] %vm626, %v624
        %628 = vst.msk [vmem:[%s252 + $0x8] sm:$0xff] %vm626, %v625
      $region52: #{tpu_custom_call.1} parent=39 // pred_fallthru
        _
      %p629 = scmp.eq.s32.totalorder %s21, 3
      // Predicated region
      $region53: #{tpu_custom_call.1} parent=39 // pred_check
        %p630 = pneg %p629
      $region54: #{tpu_custom_call.1} parent=39 // pred_check_branch
        %632 = sbr.rel (%p630) target = $region56
      $region55: #{tpu_custom_call.1} parent=39 // pred_region
        %v633 = vld [vmem:[%s252] sm:$0xff]
        %v634 = vld [vmem:[%s252 + $0x8] sm:$0xff]
        %v635 = vmul.f32 %v633, 0.25
        %v636 = vmul.f32 %v634, 0.25
        %vm637 = vcmask 64512
        %638 = vst.msk [vmem:[%s252] sm:$0xff] %vm637, %v635
        %639 = vst.msk [vmem:[%s252 + $0x8] sm:$0xff] %vm637, %v636
      $region56: #{tpu_custom_call.1} parent=39 // pred_fallthru
        _
      %s640 = smul.u32 2, %s20
      %p641 = scmp.lt.s32.totalorder %s640, 1
      %s642 = scalar_select %p641, %s640, 1
      %s643 = smul.addr %s642, 8
      %s644 = scalar_lea.vmem %s5, %s643
      // Predicated region
      $region57: #{tpu_custom_call.1} parent=39 // pred_check
        %p645 = pneg %p161
      $region58: #{tpu_custom_call.1} parent=39 // pred_check_branch
        %647 = sbr.rel (%p645) target = $region60
      $region59: #{tpu_custom_call.1} parent=39 // pred_region
        %s648 = smul.u32 2, %s20
      $region60: #{tpu_custom_call.1} parent=39 // pred_fallthru
        _
      // Predicated region
      $region61: #{tpu_custom_call.1} parent=39 // pred_check
        %p649 = pneg %p161
      $region62: #{tpu_custom_call.1} parent=39 // pred_check_branch
        %651 = sbr.rel (%p649) target = $region64
      $region63: #{tpu_custom_call.1} parent=39 // pred_region
        %s652 = smul.u32 2, %s20
        %p653 = scmp.lt.s32.totalorder %s652, 1
        %s654 = scalar_select %p653, %s652, 1
        %s655 = smul.addr %s654, 8
        %s656 = scalar_lea.vmem %s5, %s655
      $region64: #{tpu_custom_call.1} parent=39 // pred_fallthru
        _
    $region40: #{tpu_custom_call.1} parent=5 // pred_fallthru
      _
    %p657 = scmp.le.s32.totalorder 2, %s11
    // Predicated region
    $region65: #{tpu_custom_call.1} parent=5 // pred_check
      %p658 = pneg %p657
    $region66: #{tpu_custom_call.1} parent=5 // pred_check_branch
      %660 = sbr.rel (%p658) target = $region68
    $region67: #{tpu_custom_call.1} parent=5 // pred_region
      %s661 = ssub.s32 %s11, 2
    $region68: #{tpu_custom_call.1} parent=5 // pred_fallthru
      _
  $region6: #{tpu_custom_call.1} parent=0 // loop_footer
    %s15 = sadd.s32 1, %s11
  $region7: #{tpu_custom_call.1} parent=0 // loop_footer_branch
    %10 = sbr.rel target = $region3
  $region8: #{tpu_custom_call.1} parent=0 // loop_exit
    _

</llo_original>
